<compile_context>
chip_gen: v7x
topology: tpu7x:2x2x1
jax: 0.10.0
libtpu: 0.0.40
codegen_flags: <defaults>
</compile_context>

<pallas_src>
import jax
import jax.numpy as jnp
from jax.experimental import pallas as pl
from jax.experimental.pallas import tpu as pltpu


def _log_sigmoid(x):
    # log(sigmoid(x)) = -softplus(-x) = min(x, 0) - log1p(exp(-|x|))
    # Branch-free, one exp + one log1p, stable for large |x|.
    return jnp.minimum(x, 0.0) - jnp.log1p(jnp.exp(-jnp.abs(x)))


def _make_cbow_kernel(C):
    def cbow_kernel(ctx_ref, tgt_ref, u_hbm, v_hbm, out_ref, buf, sem):
        # ctx_ref: SMEM (2, C) int32 context ids   (scalar prefetch)
        # tgt_ref: SMEM (2,)   int32 target ids    (scalar prefetch)
        # u_hbm:   HBM (V, D) f32 u-embedding table (raw ref, manual DMA)
        # v_hbm:   HBM (V, D) f32 v-embedding table (raw ref, manual DMA)
        # out_ref: VMEM (1, 128) f32 -- final loss broadcast across lanes
        # buf:     VMEM (16, D) f32 gather buffer; pair p -> rows [8p, 8p+C]
        # sem:     DMA semaphores (2, C + 1)
        copies = []
        for p in range(2):
            for c in range(C):
                cp = pltpu.make_async_copy(
                    u_hbm.at[pl.ds(ctx_ref[p, c], 1)],
                    buf.at[pl.ds(8 * p + c, 1)],
                    sem.at[p, c])
                cp.start()
                copies.append(cp)
            cp = pltpu.make_async_copy(
                v_hbm.at[pl.ds(tgt_ref[p], 1)],
                buf.at[pl.ds(8 * p + C, 1)],
                sem.at[p, C])
            cp.start()
            copies.append(cp)
        # All 2*C + 2 row fetches are in flight; wait once for the lot.
        for cp in copies:
            cp.wait()

        # Context sums: one sublane (XLU) reduce per pair.
        pos_u = jnp.sum(buf[0:C, :], axis=0, keepdims=True)        # (1, D)
        neg_u = jnp.sum(buf[8:8 + C, :], axis=0, keepdims=True)    # (1, D)
        pos_v = buf[C:C + 1, :]                                     # (1, D)
        neg_v = buf[8 + C:8 + C + 1, :]                             # (1, D)

        # VPU multiply + lane reduce; no MXU involvement.
        pos_dot = jnp.sum(pos_u * pos_v)
        neg_dot = jnp.sum(neg_u * neg_v)

        loss = -(_log_sigmoid(pos_dot) + _log_sigmoid(-neg_dot))
        out_ref[...] = jnp.full(out_ref.shape, loss, dtype=jnp.float32)

    return cbow_kernel


def cbow_loss(u_emb, v_emb, pos_pair, neg_pair):
    """Pallas implementation of CBOW.forward. Returns loss of shape (1,)."""
    V, D = u_emb.shape
    pos_ctx, pos_tgt = pos_pair
    neg_ctx, neg_tgt = neg_pair
    ctx_ids = jnp.stack([jnp.asarray(pos_ctx), jnp.asarray(neg_ctx)]).astype(jnp.int32)
    tgt_ids = jnp.array([pos_tgt, neg_tgt], dtype=jnp.int32)
    C = int(ctx_ids.shape[1])
    assert C <= 7, "gather buffer packs C context rows + 1 target row per 8-sublane group"

    out = pl.pallas_call(
        _make_cbow_kernel(C),
        out_shape=jax.ShapeDtypeStruct((1, 128), jnp.float32),
        grid_spec=pltpu.PrefetchScalarGridSpec(
            num_scalar_prefetch=2,
            grid=(1,),
            in_specs=[
                pl.BlockSpec(memory_space=pl.ANY),   # u_embeddings stay in HBM
                pl.BlockSpec(memory_space=pl.ANY),   # v_embeddings stay in HBM
            ],
            out_specs=pl.BlockSpec((1, 128), lambda i, ctx, tgt: (0, 0)),
            scratch_shapes=[
                pltpu.VMEM((16, D), jnp.float32),
                pltpu.SemaphoreType.DMA((2, C + 1)),
            ],
        ),
        compiler_params=pltpu.CompilerParams(
            dimension_semantics=("arbitrary",)),
    )(ctx_ids, tgt_ids, u_emb, v_emb)

    return out[0, 0][None]   # shape (1,), matching the torch module output


def cbow_loss_ref(u_emb, v_emb, pos_pair, neg_pair):
    """Pure-JAX reference mirroring the PyTorch forward exactly."""
    pos_u = jnp.sum(u_emb[jnp.asarray(pos_pair[0])], axis=0)
    pos_v = v_emb[pos_pair[1]]
    pos_score = _log_sigmoid(jnp.sum(pos_u * pos_v))
    neg_u = jnp.sum(u_emb[jnp.asarray(neg_pair[0])], axis=0)
    neg_v = v_emb[neg_pair[1]]
    neg_score = _log_sigmoid(-1.0 * jnp.sum(neg_u * neg_v))
    return -(pos_score + neg_score)[None]


if __name__ == "__main__":
    vocab_size, emb_dim = 64, 128

    key = jax.random.PRNGKey(0)
    ku, kv = jax.random.split(key)
    init_range = 0.5 / emb_dim
    # u_embeddings ~ U(-0.5/emb_dim, 0.5/emb_dim), as in the module's init_emb.
    u_emb = jax.random.uniform(ku, (vocab_size, emb_dim), jnp.float32,
                               minval=-init_range, maxval=init_range)
    # The module zero-inits v_embeddings (uniform_(-0, 0)); use small
    # deterministic random values so the correctness check is non-trivial.
    v_emb = jax.random.uniform(kv, (vocab_size, emb_dim), jnp.float32,
                               minval=-init_range, maxval=init_range)

    # Default arguments from the PyTorch forward signature.
    pos_pair = (jnp.array([3, 7, 21, 42], dtype=jnp.int32), jnp.int32(9))
    neg_pair = (jnp.array([3, 7, 21, 42], dtype=jnp.int32), jnp.int32(18))

    loss = cbow_loss(u_emb, v_emb, pos_pair, neg_pair)
    jax.block_until_ready(loss)

    ref = cbow_loss_ref(u_emb, v_emb, pos_pair, neg_pair)
    assert loss.shape == (1,)
    assert jnp.allclose(loss, ref, atol=1e-5, rtol=1e-5), (loss, ref)

    print("KERNEL_OK")
</pallas_src>

<mosaic_0001>
module attributes {stable_mosaic.version = 11 : i64} {
  func.func @cbow_kernel(%arg0: i32, %arg1: memref<2x4xi32, #tpu.memory_space<smem>>, %arg2: memref<2xi32, #tpu.memory_space<smem>>, %arg3: memref<64x128xf32, #tpu.memory_space<any>>, %arg4: memref<64x128xf32, #tpu.memory_space<any>>, %arg5: memref<1x128xf32, #tpu.memory_space<vmem>>, %arg6: memref<16x128xf32, #tpu.memory_space<vmem>>, %arg7: memref<2x5x!tpu.dma_semaphore, #tpu.memory_space<semaphore_mem>>) attributes {dimension_semantics = [#tpu.dimension_semantics<arbitrary>], iteration_bounds = array<i64: 1>, scalar_prefetch = 2 : i64, scratch_operands = 2 : i64, tpu.core_type = #tpu.core_type<tc>, window_params = [{}, {}, {pipeline_mode = #tpu.pipeline_mode<synchronous>, transform_indices = @transform_2, window_bounds = array<i64: 1, 128>}]} {
    %c0 = arith.constant 0 : index
    %c0_0 = arith.constant 0 : index
    %0 = memref.load %arg1[%c0, %c0_0] : memref<2x4xi32, #tpu.memory_space<smem>>
    %c0_i32 = arith.constant 0 : i32
    %c0_i32_1 = arith.constant 0 : i32
    %c0_i32_2 = arith.constant 0 : i32
    %1 = tpu.memref_slice %arg3[%0, %c0_i32_2] : memref<64x128xf32, #tpu.memory_space<any>> -> memref<1x128xf32, #tpu.memory_space<any>>
    %c0_i32_3 = arith.constant 0 : i32
    %c0_i32_4 = arith.constant 0 : i32
    %2 = tpu.memref_slice %arg6[%c0_i32_3, %c0_i32_4] : memref<16x128xf32, #tpu.memory_space<vmem>> -> memref<1x128xf32, #tpu.memory_space<vmem>>
    %3 = tpu.memref_slice %arg7[%c0_i32, %c0_i32_1] : memref<2x5x!tpu.dma_semaphore, #tpu.memory_space<semaphore_mem>> -> memref<1x1x!tpu.dma_semaphore, #tpu.memory_space<semaphore_mem>>
    %4 = tpu.memref_squeeze %3 : memref<1x1x!tpu.dma_semaphore, #tpu.memory_space<semaphore_mem>> -> memref<!tpu.dma_semaphore, #tpu.memory_space<semaphore_mem>>
    tpu.enqueue_dma source(%1 : memref<1x128xf32, #tpu.memory_space<any>>) target(%2 : memref<1x128xf32, #tpu.memory_space<vmem>>) target_semaphore(%4 : memref<!tpu.dma_semaphore, #tpu.memory_space<semaphore_mem>>)
    %c0_5 = arith.constant 0 : index
    %c1 = arith.constant 1 : index
    %5 = memref.load %arg1[%c0_5, %c1] : memref<2x4xi32, #tpu.memory_space<smem>>
    %c0_i32_6 = arith.constant 0 : i32
    %c1_i32 = arith.constant 1 : i32
    %c0_i32_7 = arith.constant 0 : i32
    %6 = tpu.memref_slice %arg3[%5, %c0_i32_7] : memref<64x128xf32, #tpu.memory_space<any>> -> memref<1x128xf32, #tpu.memory_space<any>>
    %c1_i32_8 = arith.constant 1 : i32
    %c0_i32_9 = arith.constant 0 : i32
    %7 = tpu.memref_slice %arg6[%c1_i32_8, %c0_i32_9] : memref<16x128xf32, #tpu.memory_space<vmem>> -> memref<1x128xf32, #tpu.memory_space<vmem>>
    %8 = tpu.memref_slice %arg7[%c0_i32_6, %c1_i32] : memref<2x5x!tpu.dma_semaphore, #tpu.memory_space<semaphore_mem>> -> memref<1x1x!tpu.dma_semaphore, #tpu.memory_space<semaphore_mem>>
    %9 = tpu.memref_squeeze %8 : memref<1x1x!tpu.dma_semaphore, #tpu.memory_space<semaphore_mem>> -> memref<!tpu.dma_semaphore, #tpu.memory_space<semaphore_mem>>
    tpu.enqueue_dma source(%6 : memref<1x128xf32, #tpu.memory_space<any>>) target(%7 : memref<1x128xf32, #tpu.memory_space<vmem>>) target_semaphore(%9 : memref<!tpu.dma_semaphore, #tpu.memory_space<semaphore_mem>>)
    %c0_10 = arith.constant 0 : index
    %c2 = arith.constant 2 : index
    %10 = memref.load %arg1[%c0_10, %c2] : memref<2x4xi32, #tpu.memory_space<smem>>
    %c0_i32_11 = arith.constant 0 : i32
    %c2_i32 = arith.constant 2 : i32
    %c0_i32_12 = arith.constant 0 : i32
    %11 = tpu.memref_slice %arg3[%10, %c0_i32_12] : memref<64x128xf32, #tpu.memory_space<any>> -> memref<1x128xf32, #tpu.memory_space<any>>
    %c2_i32_13 = arith.constant 2 : i32
    %c0_i32_14 = arith.constant 0 : i32
    %12 = tpu.memref_slice %arg6[%c2_i32_13, %c0_i32_14] : memref<16x128xf32, #tpu.memory_space<vmem>> -> memref<1x128xf32, #tpu.memory_space<vmem>>
    %13 = tpu.memref_slice %arg7[%c0_i32_11, %c2_i32] : memref<2x5x!tpu.dma_semaphore, #tpu.memory_space<semaphore_mem>> -> memref<1x1x!tpu.dma_semaphore, #tpu.memory_space<semaphore_mem>>
    %14 = tpu.memref_squeeze %13 : memref<1x1x!tpu.dma_semaphore, #tpu.memory_space<semaphore_mem>> -> memref<!tpu.dma_semaphore, #tpu.memory_space<semaphore_mem>>
    tpu.enqueue_dma source(%11 : memref<1x128xf32, #tpu.memory_space<any>>) target(%12 : memref<1x128xf32, #tpu.memory_space<vmem>>) target_semaphore(%14 : memref<!tpu.dma_semaphore, #tpu.memory_space<semaphore_mem>>)
    %c0_15 = arith.constant 0 : index
    %c3 = arith.constant 3 : index
    %15 = memref.load %arg1[%c0_15, %c3] : memref<2x4xi32, #tpu.memory_space<smem>>
    %c0_i32_16 = arith.constant 0 : i32
    %c3_i32 = arith.constant 3 : i32
    %c0_i32_17 = arith.constant 0 : i32
    %16 = tpu.memref_slice %arg3[%15, %c0_i32_17] : memref<64x128xf32, #tpu.memory_space<any>> -> memref<1x128xf32, #tpu.memory_space<any>>
    %c3_i32_18 = arith.constant 3 : i32
    %c0_i32_19 = arith.constant 0 : i32
    %17 = tpu.memref_slice %arg6[%c3_i32_18, %c0_i32_19] : memref<16x128xf32, #tpu.memory_space<vmem>> -> memref<1x128xf32, #tpu.memory_space<vmem>>
    %18 = tpu.memref_slice %arg7[%c0_i32_16, %c3_i32] : memref<2x5x!tpu.dma_semaphore, #tpu.memory_space<semaphore_mem>> -> memref<1x1x!tpu.dma_semaphore, #tpu.memory_space<semaphore_mem>>
    %19 = tpu.memref_squeeze %18 : memref<1x1x!tpu.dma_semaphore, #tpu.memory_space<semaphore_mem>> -> memref<!tpu.dma_semaphore, #tpu.memory_space<semaphore_mem>>
    tpu.enqueue_dma source(%16 : memref<1x128xf32, #tpu.memory_space<any>>) target(%17 : memref<1x128xf32, #tpu.memory_space<vmem>>) target_semaphore(%19 : memref<!tpu.dma_semaphore, #tpu.memory_space<semaphore_mem>>)
    %c0_20 = arith.constant 0 : index
    %20 = memref.load %arg2[%c0_20] : memref<2xi32, #tpu.memory_space<smem>>
    %c0_i32_21 = arith.constant 0 : i32
    %c4_i32 = arith.constant 4 : i32
    %c0_i32_22 = arith.constant 0 : i32
    %21 = tpu.memref_slice %arg4[%20, %c0_i32_22] : memref<64x128xf32, #tpu.memory_space<any>> -> memref<1x128xf32, #tpu.memory_space<any>>
    %c4_i32_23 = arith.constant 4 : i32
    %c0_i32_24 = arith.constant 0 : i32
    %22 = tpu.memref_slice %arg6[%c4_i32_23, %c0_i32_24] : memref<16x128xf32, #tpu.memory_space<vmem>> -> memref<1x128xf32, #tpu.memory_space<vmem>>
    %23 = tpu.memref_slice %arg7[%c0_i32_21, %c4_i32] : memref<2x5x!tpu.dma_semaphore, #tpu.memory_space<semaphore_mem>> -> memref<1x1x!tpu.dma_semaphore, #tpu.memory_space<semaphore_mem>>
    %24 = tpu.memref_squeeze %23 : memref<1x1x!tpu.dma_semaphore, #tpu.memory_space<semaphore_mem>> -> memref<!tpu.dma_semaphore, #tpu.memory_space<semaphore_mem>>
    tpu.enqueue_dma source(%21 : memref<1x128xf32, #tpu.memory_space<any>>) target(%22 : memref<1x128xf32, #tpu.memory_space<vmem>>) target_semaphore(%24 : memref<!tpu.dma_semaphore, #tpu.memory_space<semaphore_mem>>)
    %c1_25 = arith.constant 1 : index
    %c0_26 = arith.constant 0 : index
    %25 = memref.load %arg1[%c1_25, %c0_26] : memref<2x4xi32, #tpu.memory_space<smem>>
    %c1_i32_27 = arith.constant 1 : i32
    %c0_i32_28 = arith.constant 0 : i32
    %c0_i32_29 = arith.constant 0 : i32
    %26 = tpu.memref_slice %arg3[%25, %c0_i32_29] : memref<64x128xf32, #tpu.memory_space<any>> -> memref<1x128xf32, #tpu.memory_space<any>>
    %c8_i32 = arith.constant 8 : i32
    %c0_i32_30 = arith.constant 0 : i32
    %27 = tpu.memref_slice %arg6[%c8_i32, %c0_i32_30] : memref<16x128xf32, #tpu.memory_space<vmem>> -> memref<1x128xf32, #tpu.memory_space<vmem>>
    %28 = tpu.memref_slice %arg7[%c1_i32_27, %c0_i32_28] : memref<2x5x!tpu.dma_semaphore, #tpu.memory_space<semaphore_mem>> -> memref<1x1x!tpu.dma_semaphore, #tpu.memory_space<semaphore_mem>>
    %29 = tpu.memref_squeeze %28 : memref<1x1x!tpu.dma_semaphore, #tpu.memory_space<semaphore_mem>> -> memref<!tpu.dma_semaphore, #tpu.memory_space<semaphore_mem>>
    tpu.enqueue_dma source(%26 : memref<1x128xf32, #tpu.memory_space<any>>) target(%27 : memref<1x128xf32, #tpu.memory_space<vmem>>) target_semaphore(%29 : memref<!tpu.dma_semaphore, #tpu.memory_space<semaphore_mem>>)
    %c1_31 = arith.constant 1 : index
    %c1_32 = arith.constant 1 : index
    %30 = memref.load %arg1[%c1_31, %c1_32] : memref<2x4xi32, #tpu.memory_space<smem>>
    %c1_i32_33 = arith.constant 1 : i32
    %c1_i32_34 = arith.constant 1 : i32
    %c0_i32_35 = arith.constant 0 : i32
    %31 = tpu.memref_slice %arg3[%30, %c0_i32_35] : memref<64x128xf32, #tpu.memory_space<any>> -> memref<1x128xf32, #tpu.memory_space<any>>
    %c9_i32 = arith.constant 9 : i32
    %c0_i32_36 = arith.constant 0 : i32
    %32 = tpu.memref_slice %arg6[%c9_i32, %c0_i32_36] : memref<16x128xf32, #tpu.memory_space<vmem>> -> memref<1x128xf32, #tpu.memory_space<vmem>>
    %33 = tpu.memref_slice %arg7[%c1_i32_33, %c1_i32_34] : memref<2x5x!tpu.dma_semaphore, #tpu.memory_space<semaphore_mem>> -> memref<1x1x!tpu.dma_semaphore, #tpu.memory_space<semaphore_mem>>
    %34 = tpu.memref_squeeze %33 : memref<1x1x!tpu.dma_semaphore, #tpu.memory_space<semaphore_mem>> -> memref<!tpu.dma_semaphore, #tpu.memory_space<semaphore_mem>>
    tpu.enqueue_dma source(%31 : memref<1x128xf32, #tpu.memory_space<any>>) target(%32 : memref<1x128xf32, #tpu.memory_space<vmem>>) target_semaphore(%34 : memref<!tpu.dma_semaphore, #tpu.memory_space<semaphore_mem>>)
    %c1_37 = arith.constant 1 : index
    %c2_38 = arith.constant 2 : index
    %35 = memref.load %arg1[%c1_37, %c2_38] : memref<2x4xi32, #tpu.memory_space<smem>>
    %c1_i32_39 = arith.constant 1 : i32
    %c2_i32_40 = arith.constant 2 : i32
    %c0_i32_41 = arith.constant 0 : i32
    %36 = tpu.memref_slice %arg3[%35, %c0_i32_41] : memref<64x128xf32, #tpu.memory_space<any>> -> memref<1x128xf32, #tpu.memory_space<any>>
    %c10_i32 = arith.constant 10 : i32
    %c0_i32_42 = arith.constant 0 : i32
    %37 = tpu.memref_slice %arg6[%c10_i32, %c0_i32_42] : memref<16x128xf32, #tpu.memory_space<vmem>> -> memref<1x128xf32, #tpu.memory_space<vmem>>
    %38 = tpu.memref_slice %arg7[%c1_i32_39, %c2_i32_40] : memref<2x5x!tpu.dma_semaphore, #tpu.memory_space<semaphore_mem>> -> memref<1x1x!tpu.dma_semaphore, #tpu.memory_space<semaphore_mem>>
    %39 = tpu.memref_squeeze %38 : memref<1x1x!tpu.dma_semaphore, #tpu.memory_space<semaphore_mem>> -> memref<!tpu.dma_semaphore, #tpu.memory_space<semaphore_mem>>
    tpu.enqueue_dma source(%36 : memref<1x128xf32, #tpu.memory_space<any>>) target(%37 : memref<1x128xf32, #tpu.memory_space<vmem>>) target_semaphore(%39 : memref<!tpu.dma_semaphore, #tpu.memory_space<semaphore_mem>>)
    %c1_43 = arith.constant 1 : index
    %c3_44 = arith.constant 3 : index
    %40 = memref.load %arg1[%c1_43, %c3_44] : memref<2x4xi32, #tpu.memory_space<smem>>
    %c1_i32_45 = arith.constant 1 : i32
    %c3_i32_46 = arith.constant 3 : i32
    %c0_i32_47 = arith.constant 0 : i32
    %41 = tpu.memref_slice %arg3[%40, %c0_i32_47] : memref<64x128xf32, #tpu.memory_space<any>> -> memref<1x128xf32, #tpu.memory_space<any>>
    %c11_i32 = arith.constant 11 : i32
    %c0_i32_48 = arith.constant 0 : i32
    %42 = tpu.memref_slice %arg6[%c11_i32, %c0_i32_48] : memref<16x128xf32, #tpu.memory_space<vmem>> -> memref<1x128xf32, #tpu.memory_space<vmem>>
    %43 = tpu.memref_slice %arg7[%c1_i32_45, %c3_i32_46] : memref<2x5x!tpu.dma_semaphore, #tpu.memory_space<semaphore_mem>> -> memref<1x1x!tpu.dma_semaphore, #tpu.memory_space<semaphore_mem>>
    %44 = tpu.memref_squeeze %43 : memref<1x1x!tpu.dma_semaphore, #tpu.memory_space<semaphore_mem>> -> memref<!tpu.dma_semaphore, #tpu.memory_space<semaphore_mem>>
    tpu.enqueue_dma source(%41 : memref<1x128xf32, #tpu.memory_space<any>>) target(%42 : memref<1x128xf32, #tpu.memory_space<vmem>>) target_semaphore(%44 : memref<!tpu.dma_semaphore, #tpu.memory_space<semaphore_mem>>)
    %c1_49 = arith.constant 1 : index
    %45 = memref.load %arg2[%c1_49] : memref<2xi32, #tpu.memory_space<smem>>
    %c1_i32_50 = arith.constant 1 : i32
    %c4_i32_51 = arith.constant 4 : i32
    %c0_i32_52 = arith.constant 0 : i32
    %46 = tpu.memref_slice %arg4[%45, %c0_i32_52] : memref<64x128xf32, #tpu.memory_space<any>> -> memref<1x128xf32, #tpu.memory_space<any>>
    %c12_i32 = arith.constant 12 : i32
    %c0_i32_53 = arith.constant 0 : i32
    %47 = tpu.memref_slice %arg6[%c12_i32, %c0_i32_53] : memref<16x128xf32, #tpu.memory_space<vmem>> -> memref<1x128xf32, #tpu.memory_space<vmem>>
    %48 = tpu.memref_slice %arg7[%c1_i32_50, %c4_i32_51] : memref<2x5x!tpu.dma_semaphore, #tpu.memory_space<semaphore_mem>> -> memref<1x1x!tpu.dma_semaphore, #tpu.memory_space<semaphore_mem>>
    %49 = tpu.memref_squeeze %48 : memref<1x1x!tpu.dma_semaphore, #tpu.memory_space<semaphore_mem>> -> memref<!tpu.dma_semaphore, #tpu.memory_space<semaphore_mem>>
    tpu.enqueue_dma source(%46 : memref<1x128xf32, #tpu.memory_space<any>>) target(%47 : memref<1x128xf32, #tpu.memory_space<vmem>>) target_semaphore(%49 : memref<!tpu.dma_semaphore, #tpu.memory_space<semaphore_mem>>)
    %c0_i32_54 = arith.constant 0 : i32
    %c0_i32_55 = arith.constant 0 : i32
    %c0_i32_56 = arith.constant 0 : i32
    %50 = tpu.memref_slice %arg3[%0, %c0_i32_56] : memref<64x128xf32, #tpu.memory_space<any>> -> memref<1x128xf32, #tpu.memory_space<any>>
    %c0_i32_57 = arith.constant 0 : i32
    %c0_i32_58 = arith.constant 0 : i32
    %51 = tpu.memref_slice %arg6[%c0_i32_57, %c0_i32_58] : memref<16x128xf32, #tpu.memory_space<vmem>> -> memref<1x128xf32, #tpu.memory_space<vmem>>
    %52 = tpu.memref_slice %arg7[%c0_i32_54, %c0_i32_55] : memref<2x5x!tpu.dma_semaphore, #tpu.memory_space<semaphore_mem>> -> memref<1x1x!tpu.dma_semaphore, #tpu.memory_space<semaphore_mem>>
    %53 = tpu.memref_squeeze %52 : memref<1x1x!tpu.dma_semaphore, #tpu.memory_space<semaphore_mem>> -> memref<!tpu.dma_semaphore, #tpu.memory_space<semaphore_mem>>
    tpu.wait_dma2 semaphore(%53 : memref<!tpu.dma_semaphore, #tpu.memory_space<semaphore_mem>>) src(%50 : memref<1x128xf32, #tpu.memory_space<any>>) dst(%51 : memref<1x128xf32, #tpu.memory_space<vmem>>)
    %c0_i32_59 = arith.constant 0 : i32
    %c1_i32_60 = arith.constant 1 : i32
    %c0_i32_61 = arith.constant 0 : i32
    %54 = tpu.memref_slice %arg3[%5, %c0_i32_61] : memref<64x128xf32, #tpu.memory_space<any>> -> memref<1x128xf32, #tpu.memory_space<any>>
    %c1_i32_62 = arith.constant 1 : i32
    %c0_i32_63 = arith.constant 0 : i32
    %55 = tpu.memref_slice %arg6[%c1_i32_62, %c0_i32_63] : memref<16x128xf32, #tpu.memory_space<vmem>> -> memref<1x128xf32, #tpu.memory_space<vmem>>
    %56 = tpu.memref_slice %arg7[%c0_i32_59, %c1_i32_60] : memref<2x5x!tpu.dma_semaphore, #tpu.memory_space<semaphore_mem>> -> memref<1x1x!tpu.dma_semaphore, #tpu.memory_space<semaphore_mem>>
    %57 = tpu.memref_squeeze %56 : memref<1x1x!tpu.dma_semaphore, #tpu.memory_space<semaphore_mem>> -> memref<!tpu.dma_semaphore, #tpu.memory_space<semaphore_mem>>
    tpu.wait_dma2 semaphore(%57 : memref<!tpu.dma_semaphore, #tpu.memory_space<semaphore_mem>>) src(%54 : memref<1x128xf32, #tpu.memory_space<any>>) dst(%55 : memref<1x128xf32, #tpu.memory_space<vmem>>)
    %c0_i32_64 = arith.constant 0 : i32
    %c2_i32_65 = arith.constant 2 : i32
    %c0_i32_66 = arith.constant 0 : i32
    %58 = tpu.memref_slice %arg3[%10, %c0_i32_66] : memref<64x128xf32, #tpu.memory_space<any>> -> memref<1x128xf32, #tpu.memory_space<any>>
    %c2_i32_67 = arith.constant 2 : i32
    %c0_i32_68 = arith.constant 0 : i32
    %59 = tpu.memref_slice %arg6[%c2_i32_67, %c0_i32_68] : memref<16x128xf32, #tpu.memory_space<vmem>> -> memref<1x128xf32, #tpu.memory_space<vmem>>
    %60 = tpu.memref_slice %arg7[%c0_i32_64, %c2_i32_65] : memref<2x5x!tpu.dma_semaphore, #tpu.memory_space<semaphore_mem>> -> memref<1x1x!tpu.dma_semaphore, #tpu.memory_space<semaphore_mem>>
    %61 = tpu.memref_squeeze %60 : memref<1x1x!tpu.dma_semaphore, #tpu.memory_space<semaphore_mem>> -> memref<!tpu.dma_semaphore, #tpu.memory_space<semaphore_mem>>
    tpu.wait_dma2 semaphore(%61 : memref<!tpu.dma_semaphore, #tpu.memory_space<semaphore_mem>>) src(%58 : memref<1x128xf32, #tpu.memory_space<any>>) dst(%59 : memref<1x128xf32, #tpu.memory_space<vmem>>)
    %c0_i32_69 = arith.constant 0 : i32
    %c3_i32_70 = arith.constant 3 : i32
    %c0_i32_71 = arith.constant 0 : i32
    %62 = tpu.memref_slice %arg3[%15, %c0_i32_71] : memref<64x128xf32, #tpu.memory_space<any>> -> memref<1x128xf32, #tpu.memory_space<any>>
    %c3_i32_72 = arith.constant 3 : i32
    %c0_i32_73 = arith.constant 0 : i32
    %63 = tpu.memref_slice %arg6[%c3_i32_72, %c0_i32_73] : memref<16x128xf32, #tpu.memory_space<vmem>> -> memref<1x128xf32, #tpu.memory_space<vmem>>
    %64 = tpu.memref_slice %arg7[%c0_i32_69, %c3_i32_70] : memref<2x5x!tpu.dma_semaphore, #tpu.memory_space<semaphore_mem>> -> memref<1x1x!tpu.dma_semaphore, #tpu.memory_space<semaphore_mem>>
    %65 = tpu.memref_squeeze %64 : memref<1x1x!tpu.dma_semaphore, #tpu.memory_space<semaphore_mem>> -> memref<!tpu.dma_semaphore, #tpu.memory_space<semaphore_mem>>
    tpu.wait_dma2 semaphore(%65 : memref<!tpu.dma_semaphore, #tpu.memory_space<semaphore_mem>>) src(%62 : memref<1x128xf32, #tpu.memory_space<any>>) dst(%63 : memref<1x128xf32, #tpu.memory_space<vmem>>)
    %c0_i32_74 = arith.constant 0 : i32
    %c4_i32_75 = arith.constant 4 : i32
    %c0_i32_76 = arith.constant 0 : i32
    %66 = tpu.memref_slice %arg4[%20, %c0_i32_76] : memref<64x128xf32, #tpu.memory_space<any>> -> memref<1x128xf32, #tpu.memory_space<any>>
    %c4_i32_77 = arith.constant 4 : i32
    %c0_i32_78 = arith.constant 0 : i32
    %67 = tpu.memref_slice %arg6[%c4_i32_77, %c0_i32_78] : memref<16x128xf32, #tpu.memory_space<vmem>> -> memref<1x128xf32, #tpu.memory_space<vmem>>
    %68 = tpu.memref_slice %arg7[%c0_i32_74, %c4_i32_75] : memref<2x5x!tpu.dma_semaphore, #tpu.memory_space<semaphore_mem>> -> memref<1x1x!tpu.dma_semaphore, #tpu.memory_space<semaphore_mem>>
    %69 = tpu.memref_squeeze %68 : memref<1x1x!tpu.dma_semaphore, #tpu.memory_space<semaphore_mem>> -> memref<!tpu.dma_semaphore, #tpu.memory_space<semaphore_mem>>
    tpu.wait_dma2 semaphore(%69 : memref<!tpu.dma_semaphore, #tpu.memory_space<semaphore_mem>>) src(%66 : memref<1x128xf32, #tpu.memory_space<any>>) dst(%67 : memref<1x128xf32, #tpu.memory_space<vmem>>)
    %c1_i32_79 = arith.constant 1 : i32
    %c0_i32_80 = arith.constant 0 : i32
    %c0_i32_81 = arith.constant 0 : i32
    %70 = tpu.memref_slice %arg3[%25, %c0_i32_81] : memref<64x128xf32, #tpu.memory_space<any>> -> memref<1x128xf32, #tpu.memory_space<any>>
    %c8_i32_82 = arith.constant 8 : i32
    %c0_i32_83 = arith.constant 0 : i32
    %71 = tpu.memref_slice %arg6[%c8_i32_82, %c0_i32_83] : memref<16x128xf32, #tpu.memory_space<vmem>> -> memref<1x128xf32, #tpu.memory_space<vmem>>
    %72 = tpu.memref_slice %arg7[%c1_i32_79, %c0_i32_80] : memref<2x5x!tpu.dma_semaphore, #tpu.memory_space<semaphore_mem>> -> memref<1x1x!tpu.dma_semaphore, #tpu.memory_space<semaphore_mem>>
    %73 = tpu.memref_squeeze %72 : memref<1x1x!tpu.dma_semaphore, #tpu.memory_space<semaphore_mem>> -> memref<!tpu.dma_semaphore, #tpu.memory_space<semaphore_mem>>
    tpu.wait_dma2 semaphore(%73 : memref<!tpu.dma_semaphore, #tpu.memory_space<semaphore_mem>>) src(%70 : memref<1x128xf32, #tpu.memory_space<any>>) dst(%71 : memref<1x128xf32, #tpu.memory_space<vmem>>)
    %c1_i32_84 = arith.constant 1 : i32
    %c1_i32_85 = arith.constant 1 : i32
    %c0_i32_86 = arith.constant 0 : i32
    %74 = tpu.memref_slice %arg3[%30, %c0_i32_86] : memref<64x128xf32, #tpu.memory_space<any>> -> memref<1x128xf32, #tpu.memory_space<any>>
    %c9_i32_87 = arith.constant 9 : i32
    %c0_i32_88 = arith.constant 0 : i32
    %75 = tpu.memref_slice %arg6[%c9_i32_87, %c0_i32_88] : memref<16x128xf32, #tpu.memory_space<vmem>> -> memref<1x128xf32, #tpu.memory_space<vmem>>
    %76 = tpu.memref_slice %arg7[%c1_i32_84, %c1_i32_85] : memref<2x5x!tpu.dma_semaphore, #tpu.memory_space<semaphore_mem>> -> memref<1x1x!tpu.dma_semaphore, #tpu.memory_space<semaphore_mem>>
    %77 = tpu.memref_squeeze %76 : memref<1x1x!tpu.dma_semaphore, #tpu.memory_space<semaphore_mem>> -> memref<!tpu.dma_semaphore, #tpu.memory_space<semaphore_mem>>
    tpu.wait_dma2 semaphore(%77 : memref<!tpu.dma_semaphore, #tpu.memory_space<semaphore_mem>>) src(%74 : memref<1x128xf32, #tpu.memory_space<any>>) dst(%75 : memref<1x128xf32, #tpu.memory_space<vmem>>)
    %c1_i32_89 = arith.constant 1 : i32
    %c2_i32_90 = arith.constant 2 : i32
    %c0_i32_91 = arith.constant 0 : i32
    %78 = tpu.memref_slice %arg3[%35, %c0_i32_91] : memref<64x128xf32, #tpu.memory_space<any>> -> memref<1x128xf32, #tpu.memory_space<any>>
    %c10_i32_92 = arith.constant 10 : i32
    %c0_i32_93 = arith.constant 0 : i32
    %79 = tpu.memref_slice %arg6[%c10_i32_92, %c0_i32_93] : memref<16x128xf32, #tpu.memory_space<vmem>> -> memref<1x128xf32, #tpu.memory_space<vmem>>
    %80 = tpu.memref_slice %arg7[%c1_i32_89, %c2_i32_90] : memref<2x5x!tpu.dma_semaphore, #tpu.memory_space<semaphore_mem>> -> memref<1x1x!tpu.dma_semaphore, #tpu.memory_space<semaphore_mem>>
    %81 = tpu.memref_squeeze %80 : memref<1x1x!tpu.dma_semaphore, #tpu.memory_space<semaphore_mem>> -> memref<!tpu.dma_semaphore, #tpu.memory_space<semaphore_mem>>
    tpu.wait_dma2 semaphore(%81 : memref<!tpu.dma_semaphore, #tpu.memory_space<semaphore_mem>>) src(%78 : memref<1x128xf32, #tpu.memory_space<any>>) dst(%79 : memref<1x128xf32, #tpu.memory_space<vmem>>)
    %c1_i32_94 = arith.constant 1 : i32
    %c3_i32_95 = arith.constant 3 : i32
    %c0_i32_96 = arith.constant 0 : i32
    %82 = tpu.memref_slice %arg3[%40, %c0_i32_96] : memref<64x128xf32, #tpu.memory_space<any>> -> memref<1x128xf32, #tpu.memory_space<any>>
    %c11_i32_97 = arith.constant 11 : i32
    %c0_i32_98 = arith.constant 0 : i32
    %83 = tpu.memref_slice %arg6[%c11_i32_97, %c0_i32_98] : memref<16x128xf32, #tpu.memory_space<vmem>> -> memref<1x128xf32, #tpu.memory_space<vmem>>
    %84 = tpu.memref_slice %arg7[%c1_i32_94, %c3_i32_95] : memref<2x5x!tpu.dma_semaphore, #tpu.memory_space<semaphore_mem>> -> memref<1x1x!tpu.dma_semaphore, #tpu.memory_space<semaphore_mem>>
    %85 = tpu.memref_squeeze %84 : memref<1x1x!tpu.dma_semaphore, #tpu.memory_space<semaphore_mem>> -> memref<!tpu.dma_semaphore, #tpu.memory_space<semaphore_mem>>
    tpu.wait_dma2 semaphore(%85 : memref<!tpu.dma_semaphore, #tpu.memory_space<semaphore_mem>>) src(%82 : memref<1x128xf32, #tpu.memory_space<any>>) dst(%83 : memref<1x128xf32, #tpu.memory_space<vmem>>)
    %c1_i32_99 = arith.constant 1 : i32
    %c4_i32_100 = arith.constant 4 : i32
    %c0_i32_101 = arith.constant 0 : i32
    %86 = tpu.memref_slice %arg4[%45, %c0_i32_101] : memref<64x128xf32, #tpu.memory_space<any>> -> memref<1x128xf32, #tpu.memory_space<any>>
    %c12_i32_102 = arith.constant 12 : i32
    %c0_i32_103 = arith.constant 0 : i32
    %87 = tpu.memref_slice %arg6[%c12_i32_102, %c0_i32_103] : memref<16x128xf32, #tpu.memory_space<vmem>> -> memref<1x128xf32, #tpu.memory_space<vmem>>
    %88 = tpu.memref_slice %arg7[%c1_i32_99, %c4_i32_100] : memref<2x5x!tpu.dma_semaphore, #tpu.memory_space<semaphore_mem>> -> memref<1x1x!tpu.dma_semaphore, #tpu.memory_space<semaphore_mem>>
    %89 = tpu.memref_squeeze %88 : memref<1x1x!tpu.dma_semaphore, #tpu.memory_space<semaphore_mem>> -> memref<!tpu.dma_semaphore, #tpu.memory_space<semaphore_mem>>
    tpu.wait_dma2 semaphore(%89 : memref<!tpu.dma_semaphore, #tpu.memory_space<semaphore_mem>>) src(%86 : memref<1x128xf32, #tpu.memory_space<any>>) dst(%87 : memref<1x128xf32, #tpu.memory_space<vmem>>)
    %c0_104 = arith.constant 0 : index
    %c0_105 = arith.constant 0 : index
    %90 = vector.load %arg6[%c0_104, %c0_105] : memref<16x128xf32, #tpu.memory_space<vmem>>, vector<4x128xf32>
    %cst = arith.constant dense<0.000000e+00> : vector<128xf32>
    %91 = vector.multi_reduction <add>, %90, %cst [0] : vector<4x128xf32> to vector<128xf32>
    %92 = vector.shape_cast %91 : vector<128xf32> to vector<1x128xf32>
    %c8 = arith.constant 8 : index
    %c0_106 = arith.constant 0 : index
    %93 = vector.load %arg6[%c8, %c0_106] : memref<16x128xf32, #tpu.memory_space<vmem>>, vector<4x128xf32>
    %cst_107 = arith.constant dense<0.000000e+00> : vector<128xf32>
    %94 = vector.multi_reduction <add>, %93, %cst_107 [0] : vector<4x128xf32> to vector<128xf32>
    %95 = vector.shape_cast %94 : vector<128xf32> to vector<1x128xf32>
    %c4 = arith.constant 4 : index
    %c0_108 = arith.constant 0 : index
    %96 = vector.load %arg6[%c4, %c0_108] : memref<16x128xf32, #tpu.memory_space<vmem>>, vector<1x128xf32>
    %c12 = arith.constant 12 : index
    %c0_109 = arith.constant 0 : index
    %97 = vector.load %arg6[%c12, %c0_109] : memref<16x128xf32, #tpu.memory_space<vmem>>, vector<1x128xf32>
    %98 = arith.mulf %92, %96 : vector<1x128xf32>
    %99 = vector.shape_cast %98 : vector<1x128xf32> to vector<1x1x128xf32>
    %cst_110 = arith.constant dense<0.000000e+00> : vector<1xf32>
    %100 = vector.multi_reduction <add>, %99, %cst_110 [1, 2] : vector<1x1x128xf32> to vector<1xf32>
    %101 = vector.shape_cast %100 : vector<1xf32> to vector<1x1x1xf32>
    %102 = vector.extract %101[0, 0, 0] : f32 from vector<1x1x1xf32>
    %103 = arith.mulf %95, %97 : vector<1x128xf32>
    %104 = vector.shape_cast %103 : vector<1x128xf32> to vector<1x1x128xf32>
    %cst_111 = arith.constant dense<0.000000e+00> : vector<1xf32>
    %105 = vector.multi_reduction <add>, %104, %cst_111 [1, 2] : vector<1x1x128xf32> to vector<1xf32>
    %106 = vector.shape_cast %105 : vector<1xf32> to vector<1x1x1xf32>
    %107 = vector.extract %106[0, 0, 0] : f32 from vector<1x1x1xf32>
    %cst_112 = arith.constant 0.000000e+00 : f32
    %108 = arith.minimumf %102, %cst_112 : f32
    %109 = math.absf %102 : f32
    %cst_113 = arith.constant 0.000000e+00 : f32
    %110 = arith.subf %cst_113, %109 : f32
    %111 = math.exp %110 : f32
    %112 = math.log1p %111 : f32
    %113 = arith.subf %108, %112 : f32
    %cst_114 = arith.constant 0.000000e+00 : f32
    %114 = arith.subf %cst_114, %107 : f32
    %cst_115 = arith.constant 0.000000e+00 : f32
    %115 = arith.minimumf %114, %cst_115 : f32
    %116 = math.absf %114 : f32
    %cst_116 = arith.constant 0.000000e+00 : f32
    %117 = arith.subf %cst_116, %116 : f32
    %118 = math.exp %117 : f32
    %119 = math.log1p %118 : f32
    %120 = arith.subf %115, %119 : f32
    %121 = arith.addf %113, %120 : f32
    %cst_117 = arith.constant 0.000000e+00 : f32
    %122 = arith.subf %cst_117, %121 : f32
    %123 = vector.broadcast %122 : f32 to vector<1x128xf32>
    %c0_118 = arith.constant 0 : index
    %c0_119 = arith.constant 0 : index
    %124 = vector.load %arg5[%c0_118, %c0_119] : memref<1x128xf32, #tpu.memory_space<vmem>>, vector<1x128xf32>
    tpu.vector_store %arg5[%c0_118, %c0_119], %123 {strides = array<i32>} : memref<1x128xf32, #tpu.memory_space<vmem>>, vector<1x128xf32>,
    return
  }
  func.func @transform_2(%arg0: i32, %arg1: memref<2x4xi32, #tpu.memory_space<smem>>, %arg2: memref<2xi32, #tpu.memory_space<smem>>) -> (i32, i32) {
    %c0_i32 = arith.constant 0 : i32
    %c0_i32_0 = arith.constant 0 : i32
    %c0_i32_1 = arith.constant 0 : i32
    return %c0_i32, %c0_i32_0 : i32, i32
  }
}

</mosaic_0001>

<llo_original>
// kernel: tpu_custom_call.1
$region0: #{tpu_custom_call.1}
  #allocation0 [shape = 'u32[]', space=smem, size = 0x4, offset = 0x4, fixed_abs, tag = 'smem constant byte address 0x4 - core index']
  #allocation1 [shape = 'u32[144,128]{1,0:T(1,128)}', space=vmem, size = 0x12000, scoped, tag = 'internal scratch']
  #allocation2 [shape = 'f32[16,128]{1,0:T(8,128)}', space=vmem, size = 0x2000, scoped, tag = 'scratch operand']
  #allocation3 [shape = 's32[10]{0}', space=sflag, size = 0x28, scoped, tag = 'scratch operand']
  #allocation4 [shape = 's32[1]{0}', space=sflag, size = 0x4, scoped, tag = 'scoped memory for tpu_custom_call.1']
  #allocation5 [shape = 'u8[1024]{0}', space=smem, size = 0x400, scoped, tag = 'prefetched SMEM operand 0']
  #allocation6 [shape = 'u8[512]{0}', space=smem, size = 0x200, scoped, tag = 'prefetched SMEM operand 1']
  #allocation9 [shape = 's32[]', space=sflag, size = 0x4, offset = 0, fixed_abs, tag = 'sflag constant byte address 0x0 - dummy sync flag']
  #allocation10 [shape = 's32[]', space=sflag, size = 0x4, offset = 0, fixed_abs, tag = 'sflag constant byte address 0x0 - dummy sync flag']
  #allocation11 [shape = 'u32[]', space=smem, size = 0x4, offset = 0x44, fixed_abs, tag = 'smem constant byte address 0x44 - assertion arg 0']
  #allocation12 [shape = 'u32[]', space=smem, size = 0x4, offset = 0x48, fixed_abs, tag = 'smem constant byte address 0x48 - assertion arg 1']
  #allocation13 [shape = 's32[]', space=sflag, size = 0x4, offset = 0, fixed_abs, tag = 'sflag constant byte address 0x0 - dummy sync flag']
  #allocation14 [shape = 's32[]', space=sflag, size = 0x4, offset = 0, fixed_abs, tag = 'sflag constant byte address 0x0 - dummy sync flag']
  #allocation15 [shape = 's32[]', space=sflag, size = 0x4, offset = 0, fixed_abs, tag = 'sflag constant byte address 0x0 - dummy sync flag']
  #allocation16 [shape = 's32[]', space=sflag, size = 0x4, offset = 0, fixed_abs, tag = 'sflag constant byte address 0x0 - dummy sync flag']
  #allocation17 [shape = 's32[]', space=sflag, size = 0x4, offset = 0, fixed_abs, tag = 'sflag constant byte address 0x0 - dummy sync flag']
  #allocation18 [shape = 's32[]', space=sflag, size = 0x4, offset = 0, fixed_abs, tag = 'sflag constant byte address 0x0 - dummy sync flag']
  #allocation19 [shape = 's32[]', space=sflag, size = 0x4, offset = 0, fixed_abs, tag = 'sflag constant byte address 0x0 - dummy sync flag']
  #allocation20 [shape = 's32[]', space=sflag, size = 0x4, offset = 0, fixed_abs, tag = 'sflag constant byte address 0x0 - dummy sync flag']
  #allocation21 [shape = 's32[]', space=sflag, size = 0x4, offset = 0, fixed_abs, tag = 'sflag constant byte address 0x0 - dummy sync flag']
  #allocation22 [shape = 's32[]', space=sflag, size = 0x4, offset = 0, fixed_abs, tag = 'sflag constant byte address 0x0 - dummy sync flag']
  #allocation23 [shape = 's32[]', space=sflag, size = 0x4, offset = 0, fixed_abs, tag = 'sflag constant byte address 0x0 - dummy sync flag']
  #allocation24 [shape = 's32[]', space=sflag, size = 0x4, offset = 0, fixed_abs, tag = 'sflag constant byte address 0x0 - dummy sync flag']
  #allocation25 [shape = 's32[]', space=sflag, size = 0x4, offset = 0, fixed_abs, tag = 'sflag constant byte address 0x0 - dummy sync flag']
  #allocation26 [shape = 's32[]', space=sflag, size = 0x4, offset = 0, fixed_abs, tag = 'sflag constant byte address 0x0 - dummy sync flag']
  #allocation27 [shape = 's32[]', space=sflag, size = 0x4, offset = 0, fixed_abs, tag = 'sflag constant byte address 0x0 - dummy sync flag']
  #allocation28 [shape = 's32[]', space=sflag, size = 0x4, offset = 0, fixed_abs, tag = 'sflag constant byte address 0x0 - dummy sync flag']
  #allocation29 [shape = 's32[]', space=sflag, size = 0x4, offset = 0, fixed_abs, tag = 'sflag constant byte address 0x0 - dummy sync flag']
  #allocation30 [shape = 's32[]', space=sflag, size = 0x4, offset = 0, fixed_abs, tag = 'sflag constant byte address 0x0 - dummy sync flag']
  %s0 = inlined_call_operand.hbm [shape: s32[2,4], index: 0, kind: input, shape index: {}]
  %s1 = inlined_call_operand.vmem [shape: s32[2], index: 1, kind: input, shape index: {}]
  %s2 = inlined_call_operand.hbm [shape: f32[64,128], index: 2, kind: input, shape index: {}]
  %s3 = inlined_call_operand.hbm [shape: f32[64,128], index: 3, kind: input, shape index: {}]
  %s4 = inlined_call_operand.hbm [shape: f32[1,128], index: 4, kind: output, shape index: {}]
  %s5 = sld [smem:[#allocation0]]
  $region50: #{tpu_custom_call.1} parent=0
    _
  %s7 = ssub.s32 1, %s5
  %s8 = scalar_select 0, %s7, %s5
  %10 = dma.hbm_to_smem %s0, 32, [#allocation5], [#allocation4]
  %s11 = sshll.u32 %s1, 4
  %s12 = int_to_ptr.vmem [resolvable:$true] %s11
  %14 = dma.vmem_to_smem %s12, 16, [#allocation6], [#allocation4]
  %15 = dma.done [#allocation4], 48
  %16 = sfence
  $region1: #{tpu_custom_call.1} parent=0
    #allocation7 [shape = 'u8[512]{0}', space=vmem, size = 0x400, scoped, tag = 'output window, operand 0, single buffered']
    #allocation8 [shape = 's32[1]{0}', space=sflag, size = 0x4, scoped, tag = 'scoped memory for tpu_custom_call.1']
    %17 = vsyncpa [#allocation8], 0
    %s18 = sld [smem:[#allocation5]]
    %s19 = smul.addr %s18, 16
    %s20 = scalar_lea.hbm %s2, %s19
    // Predicated region
    $region2: #{tpu_custom_call.1} parent=1 // pred_check
      _
    $region3: #{tpu_custom_call.1} parent=1 // pred_check_branch
      %22 = sbr.rel target = $region5
    $region4: #{tpu_custom_call.1} parent=1 // pred_region
      %23 = sst [smem:[#allocation11]] [#allocation10]
      %24 = sst [smem:[#allocation12]] [#allocation9]
    $region5: #{tpu_custom_call.1} parent=1 // pred_fallthru
      _
    %26 = shalt.err (0)
    %s28 = sshll.u32 [#allocation2], 4
    %s29 = int_to_ptr.vmem [resolvable:$true] %s28
    %31 = dma.hbm_to_vmem [thread:$0]  %s20, 16, %s29, [#allocation3]
    %s32 = sld [smem:[#allocation5 + $0x1]]
    %s33 = smul.addr %s32, 16
    %s34 = scalar_lea.hbm %s2, %s33
    %s35 = scalar_lea.vmem [#allocation2], 1
    %s36 = scalar_lea.sflag [#allocation3], 1
    // Predicated region
    $region6: #{tpu_custom_call.1} parent=1 // pred_check
      _
    $region7: #{tpu_custom_call.1} parent=1 // pred_check_branch
      %38 = sbr.rel target = $region9
    $region8: #{tpu_custom_call.1} parent=1 // pred_region
      %39 = sst [smem:[#allocation11]] [#allocation14]
      %40 = sst [smem:[#allocation12]] [#allocation13]
    $region9: #{tpu_custom_call.1} parent=1 // pred_fallthru
      _
    %42 = shalt.err (0)
    %s44 = sshll.u32 %s35, 4
    %s45 = int_to_ptr.vmem [resolvable:$true] %s44
    %47 = dma.hbm_to_vmem [thread:$0]  %s34, 16, %s45, %s36
    %s48 = sld [smem:[#allocation5 + $0x2]]
    %s49 = smul.addr %s48, 16
    %s50 = scalar_lea.hbm %s2, %s49
    %s51 = scalar_lea.vmem [#allocation2], 2
    %s52 = scalar_lea.sflag [#allocation3], 2
    // Predicated region
    $region10: #{tpu_custom_call.1} parent=1 // pred_check
      _
    $region11: #{tpu_custom_call.1} parent=1 // pred_check_branch
      %54 = sbr.rel target = $region13
    $region12: #{tpu_custom_call.1} parent=1 // pred_region
      %55 = sst [smem:[#allocation11]] [#allocation16]
      %56 = sst [smem:[#allocation12]] [#allocation15]
    $region13: #{tpu_custom_call.1} parent=1 // pred_fallthru
      _
    %58 = shalt.err (0)
    %s60 = sshll.u32 %s51, 4
    %s61 = int_to_ptr.vmem [resolvable:$true] %s60
    %63 = dma.hbm_to_vmem [thread:$0]  %s50, 16, %s61, %s52
    %s64 = sld [smem:[#allocation5 + $0x3]]
    %s65 = smul.addr %s64, 16
    %s66 = scalar_lea.hbm %s2, %s65
    %s67 = scalar_lea.vmem [#allocation2], 3
    %s68 = scalar_lea.sflag [#allocation3], 3
    // Predicated region
    $region14: #{tpu_custom_call.1} parent=1 // pred_check
      _
    $region15: #{tpu_custom_call.1} parent=1 // pred_check_branch
      %70 = sbr.rel target = $region17
    $region16: #{tpu_custom_call.1} parent=1 // pred_region
      %71 = sst [smem:[#allocation11]] [#allocation18]
      %72 = sst [smem:[#allocation12]] [#allocation17]
    $region17: #{tpu_custom_call.1} parent=1 // pred_fallthru
      _
    %74 = shalt.err (0)
    %s76 = sshll.u32 %s67, 4
    %s77 = int_to_ptr.vmem [resolvable:$true] %s76
    %79 = dma.hbm_to_vmem [thread:$0]  %s66, 16, %s77, %s68
    %s80 = sld [smem:[#allocation6]]
    %s81 = smul.addr %s80, 16
    %s82 = scalar_lea.hbm %s3, %s81
    %s83 = scalar_lea.vmem [#allocation2], 4
    %s84 = scalar_lea.sflag [#allocation3], 4
    // Predicated region
    $region18: #{tpu_custom_call.1} parent=1 // pred_check
      _
    $region19: #{tpu_custom_call.1} parent=1 // pred_check_branch
      %86 = sbr.rel target = $region21
    $region20: #{tpu_custom_call.1} parent=1 // pred_region
      %87 = sst [smem:[#allocation11]] [#allocation20]
      %88 = sst [smem:[#allocation12]] [#allocation19]
    $region21: #{tpu_custom_call.1} parent=1 // pred_fallthru
      _
    %90 = shalt.err (0)
    %s92 = sshll.u32 %s83, 4
    %s93 = int_to_ptr.vmem [resolvable:$true] %s92
    %95 = dma.hbm_to_vmem [thread:$0]  %s82, 16, %s93, %s84
    %s96 = sld [smem:[#allocation5 + $0x80]]
    %s97 = smul.addr %s96, 16
    %s98 = scalar_lea.hbm %s2, %s97
    %s99 = scalar_lea.vmem [#allocation2], 8
    %s100 = scalar_lea.sflag [#allocation3], 5
    // Predicated region
    $region22: #{tpu_custom_call.1} parent=1 // pred_check
      _
    $region23: #{tpu_custom_call.1} parent=1 // pred_check_branch
      %102 = sbr.rel target = $region25
    $region24: #{tpu_custom_call.1} parent=1 // pred_region
      %103 = sst [smem:[#allocation11]] [#allocation22]
      %104 = sst [smem:[#allocation12]] [#allocation21]
    $region25: #{tpu_custom_call.1} parent=1 // pred_fallthru
      _
    %106 = shalt.err (0)
    %s108 = sshll.u32 %s99, 4
    %s109 = int_to_ptr.vmem [resolvable:$true] %s108
    %111 = dma.hbm_to_vmem [thread:$0]  %s98, 16, %s109, %s100
    %s112 = sld [smem:[#allocation5 + $0x81]]
    %s113 = smul.addr %s112, 16
    %s114 = scalar_lea.hbm %s2, %s113
    %s115 = scalar_lea.vmem [#allocation2], 9
    %s116 = scalar_lea.sflag [#allocation3], 6
    // Predicated region
    $region26: #{tpu_custom_call.1} parent=1 // pred_check
      _
    $region27: #{tpu_custom_call.1} parent=1 // pred_check_branch
      %118 = sbr.rel target = $region29
    $region28: #{tpu_custom_call.1} parent=1 // pred_region
      %119 = sst [smem:[#allocation11]] [#allocation24]
      %120 = sst [smem:[#allocation12]] [#allocation23]
    $region29: #{tpu_custom_call.1} parent=1 // pred_fallthru
      _
    %122 = shalt.err (0)
    %s124 = sshll.u32 %s115, 4
    %s125 = int_to_ptr.vmem [resolvable:$true] %s124
    %127 = dma.hbm_to_vmem [thread:$0]  %s114, 16, %s125, %s116
    %s128 = sld [smem:[#allocation5 + $0x82]]
    %s129 = smul.addr %s128, 16
    %s130 = scalar_lea.hbm %s2, %s129
    %s131 = scalar_lea.vmem [#allocation2], 10
    %s132 = scalar_lea.sflag [#allocation3], 7
    // Predicated region
    $region30: #{tpu_custom_call.1} parent=1 // pred_check
      _
    $region31: #{tpu_custom_call.1} parent=1 // pred_check_branch
      %134 = sbr.rel target = $region33
    $region32: #{tpu_custom_call.1} parent=1 // pred_region
      %135 = sst [smem:[#allocation11]] [#allocation26]
      %136 = sst [smem:[#allocation12]] [#allocation25]
    $region33: #{tpu_custom_call.1} parent=1 // pred_fallthru
      _
    %138 = shalt.err (0)
    %s140 = sshll.u32 %s131, 4
    %s141 = int_to_ptr.vmem [resolvable:$true] %s140
    %143 = dma.hbm_to_vmem [thread:$0]  %s130, 16, %s141, %s132
    %s144 = sld [smem:[#allocation5 + $0x83]]
    %s145 = smul.addr %s144, 16
    %s146 = scalar_lea.hbm %s2, %s145
    %s147 = scalar_lea.vmem [#allocation2], 11
    %s148 = scalar_lea.sflag [#allocation3], 8
    // Predicated region
    $region34: #{tpu_custom_call.1} parent=1 // pred_check
      _
    $region35: #{tpu_custom_call.1} parent=1 // pred_check_branch
      %150 = sbr.rel target = $region37
    $region36: #{tpu_custom_call.1} parent=1 // pred_region
      %151 = sst [smem:[#allocation11]] [#allocation28]
      %152 = sst [smem:[#allocation12]] [#allocation27]
    $region37: #{tpu_custom_call.1} parent=1 // pred_fallthru
      _
    %154 = shalt.err (0)
    %s156 = sshll.u32 %s147, 4
    %s157 = int_to_ptr.vmem [resolvable:$true] %s156
    %159 = dma.hbm_to_vmem [thread:$0]  %s146, 16, %s157, %s148
    %s160 = sld [smem:[#allocation6 + $0x1]]
    %s161 = smul.addr %s160, 16
    %s162 = scalar_lea.hbm %s3, %s161
    %s163 = scalar_lea.vmem [#allocation2], 12
    %s164 = scalar_lea.sflag [#allocation3], 9
    // Predicated region
    $region38: #{tpu_custom_call.1} parent=1 // pred_check
      _
    $region39: #{tpu_custom_call.1} parent=1 // pred_check_branch
      %166 = sbr.rel target = $region41
    $region40: #{tpu_custom_call.1} parent=1 // pred_region
      %167 = sst [smem:[#allocation11]] [#allocation30]
      %168 = sst [smem:[#allocation12]] [#allocation29]
    $region41: #{tpu_custom_call.1} parent=1 // pred_fallthru
      _
    %170 = shalt.err (0)
    %s172 = sshll.u32 %s163, 4
    %s173 = int_to_ptr.vmem [resolvable:$true] %s172
    %175 = dma.hbm_to_vmem [thread:$0]  %s162, 16, %s173, %s164
    %s176 = smul.u32 1, 1
    %s177 = sshll.u32 %s176, 4
    %178 = dma.done [#allocation3], %s177
    %s179 = sshll.u32 %s176, 4
    %180 = dma.done %s36, %s179
    %s181 = sshll.u32 %s176, 4
    %182 = dma.done %s52, %s181
    %s183 = sshll.u32 %s176, 4
    %184 = dma.done %s68, %s183
    %s185 = sshll.u32 %s176, 4
    %186 = dma.done %s84, %s185
    %s187 = sshll.u32 %s176, 4
    %188 = dma.done %s100, %s187
    %s189 = sshll.u32 %s176, 4
    %190 = dma.done %s116, %s189
    %s191 = sshll.u32 %s176, 4
    %192 = dma.done %s132, %s191
    %s193 = sshll.u32 %s176, 4
    %194 = dma.done %s148, %s193
    %s195 = sshll.u32 %s176, 4
    %196 = dma.done %s164, %s195
    %v197 = vld [vmem:[#allocation2] sm:$0xf]
    %vm198 = vcmask 1043456
    %v199 = vsel %vm198, %v197, 0.0
    %v200 = vrot.slane %v199, 4
    %v201 = vadd.f32 %v199, %v200
    %v202 = vrot.slane %v201, 2
    %v203 = vadd.f32 %v201, %v202
    %v204 = vrot.slane %v203, 1
    %v205 = vadd.f32 %v203, %v204
    %v206 = vld [vmem:[#allocation2 + $0x8] sm:$0xf]
    %v207 = vsel %vm198, %v206, 0.0
    %v208 = vrot.slane %v207, 4
    %v209 = vadd.f32 %v207, %v208
    %v210 = vrot.slane %v209, 2
    %v211 = vadd.f32 %v209, %v210
    %v212 = vrot.slane %v211, 1
    %v213 = vadd.f32 %v211, %v212
    %v214 = vld [vmem:[#allocation2 + $0x4] sm:$0x1]
    %v215 = vld [vmem:[#allocation2 + $0xc] sm:$0x1]
    %v216 = vmul.f32 %v205, %v214
    %vm217 = vcmask 1040384
    %v218 = vsel %vm217, %v216, 0.0
    %219 = vadd.xlane.f32.xlu0 %v218
    %v220 = vpop.xlane.xlu0 %219
    %v221 = vrot.slane %v220, 4
    %v222 = vadd.f32 %v220, %v221
    %v223 = vrot.slane %v222, 2
    %v224 = vadd.f32 %v222, %v223
    %v225 = vrot.slane %v224, 1
    %v226 = vadd.f32 %v224, %v225
    %s227 = vtos %v226
    %v228 = vmul.f32 %v213, %v215
    %v229 = vsel %vm217, %v228, 0.0
    %230 = vadd.xlane.f32.xlu0 %v229
    %v231 = vpop.xlane.xlu0 %230
    %v232 = vrot.slane %v231, 4
    %v233 = vadd.f32 %v231, %v232
    %v234 = vrot.slane %v233, 2
    %v235 = vadd.f32 %v233, %v234
    %v236 = vrot.slane %v235, 1
    %v237 = vadd.f32 %v235, %v236
    %s238 = vtos %v237
    %s239 = smin.f32 %s227, 0.0
    %s240 = sand.u32 2147483647, %s227
    %s241 = ssub.f32 0.0, %s240
    %v242 = vstv %s241
    %v243 = vmul.f32 %v242, 1.442695
    %v244 = vpow.pop %v243
    %s245 = vtos %v244
    %v246 = vstv %s245
    %v247 = vadd.f32 %v246, 1.0
    %v248 = vlog2.pop %v247
    %v249 = vmul.f32 %v248, 0.6931472
    %v250 = vmul.f32 -0.5, %v246
    %v251 = vadd.f32 %v250, 1.0
    %v252 = vmul.f32 %v251, %v246
    %v253 = vand.u32 2147483647, %v246
    %vm254 = vcmp.lt.f32.partialorder %v253, 0.0004427343
    %v255 = vsel %vm254, %v252, %v249
    %s256 = vtos %v255
    %s257 = ssub.f32 %s239, %s256
    %s258 = ssub.f32 0.0, %s238
    %s259 = smin.f32 %s258, 0.0
    %s260 = sand.u32 2147483647, %s258
    %s261 = ssub.f32 0.0, %s260
    %v262 = vstv %s261
    %v263 = vmul.f32 %v262, 1.442695
    %v264 = vpow.pop %v263
    %s265 = vtos %v264
    %v266 = vstv %s265
    %v267 = vadd.f32 %v266, 1.0
    %v268 = vlog2.pop %v267
    %v269 = vmul.f32 %v268, 0.6931472
    %v270 = vmul.f32 -0.5, %v266
    %v271 = vadd.f32 %v270, 1.0
    %v272 = vmul.f32 %v271, %v266
    %v273 = vand.u32 2147483647, %v266
    %vm274 = vcmp.lt.f32.partialorder %v273, 0.0004427343
    %v275 = vsel %vm274, %v272, %v269
    %s276 = vtos %v275
    %s277 = ssub.f32 %s259, %s276
    %s278 = sadd.f32 %s257, %s277
    %s279 = ssub.f32 0.0, %s278
    %v280 = vstv %s279
    %281 = vst [vmem:[#allocation7] sm:$0x1] %v280
    // Predicated region
    $region42: #{tpu_custom_call.1} parent=1 // pred_check
      _
    $region43: #{tpu_custom_call.1} parent=1 // pred_check_branch
      %283 = sbr.rel (0) target = $region45
    $region44: #{tpu_custom_call.1} parent=1 // pred_region
      %s285 = ssub.s32 16, 16
      %286 = vsyncadd [#allocation8], %s285
      %s288 = sshll.u32 [#allocation7], 4
      %s289 = int_to_ptr.vmem [resolvable:$true] %s288
      %291 = dma.vmem_to_hbm [thread:$0]  %s289, 16, %s4, [#allocation8]
    $region45: #{tpu_custom_call.1} parent=1 // pred_fallthru
      _
    // Predicated region
    $region46: #{tpu_custom_call.1} parent=1 // pred_check
      _
    $region47: #{tpu_custom_call.1} parent=1 // pred_check_branch
      %293 = sbr.rel (0) target = $region49
    $region48: #{tpu_custom_call.1} parent=1 // pred_region
      %294 = dma.done [#allocation8], 16
    $region49: #{tpu_custom_call.1} parent=1 // pred_fallthru
      _
    %295 = vsyncpa [#allocation8], 1
  %296 = vsyncmov [#allocation3]
  %s297 = vpop.sfrf %296
  %p298 = scmp.eq.s32.totalorder %s297, 0
  %p299 = pneg %p298
  %301 = shalt.err (%p299)
  %s302 = scalar_lea.sflag [#allocation3], 1
  %303 = vsyncmov %s302
  %s304 = vpop.sfrf %303
  %p305 = scmp.eq.s32.totalorder %s304, 0
  %p306 = pneg %p305
  %308 = shalt.err (%p306)
  %s309 = scalar_lea.sflag [#allocation3], 2
  %310 = vsyncmov %s309
  %s311 = vpop.sfrf %310
  %p312 = scmp.eq.s32.totalorder %s311, 0
  %p313 = pneg %p312
  %315 = shalt.err (%p313)
  %s316 = scalar_lea.sflag [#allocation3], 3
  %317 = vsyncmov %s316
  %s318 = vpop.sfrf %317
  %p319 = scmp.eq.s32.totalorder %s318, 0
  %p320 = pneg %p319
  %322 = shalt.err (%p320)
  %s323 = scalar_lea.sflag [#allocation3], 4
  %324 = vsyncmov %s323
  %s325 = vpop.sfrf %324
  %p326 = scmp.eq.s32.totalorder %s325, 0
  %p327 = pneg %p326
  %329 = shalt.err (%p327)
  %s330 = scalar_lea.sflag [#allocation3], 5
  %331 = vsyncmov %s330
  %s332 = vpop.sfrf %331
  %p333 = scmp.eq.s32.totalorder %s332, 0
  %p334 = pneg %p333
  %336 = shalt.err (%p334)
  %s337 = scalar_lea.sflag [#allocation3], 6
  %338 = vsyncmov %s337
  %s339 = vpop.sfrf %338
  %p340 = scmp.eq.s32.totalorder %s339, 0
  %p341 = pneg %p340
  %343 = shalt.err (%p341)
  %s344 = scalar_lea.sflag [#allocation3], 7
  %345 = vsyncmov %s344
  %s346 = vpop.sfrf %345
  %p347 = scmp.eq.s32.totalorder %s346, 0
  %p348 = pneg %p347
  %350 = shalt.err (%p348)
  %s351 = scalar_lea.sflag [#allocation3], 8
  %352 = vsyncmov %s351
  %s353 = vpop.sfrf %352
  %p354 = scmp.eq.s32.totalorder %s353, 0
  %p355 = pneg %p354
  %357 = shalt.err (%p355)
  %s358 = scalar_lea.sflag [#allocation3], 9
  %359 = vsyncmov %s358
  %s360 = vpop.sfrf %359
  %p361 = scmp.eq.s32.totalorder %s360, 0
  %p362 = pneg %p361
  %364 = shalt.err (%p362)

</llo_original>
